<compile_context>
chip_gen: v7x
topology: tpu7x:2x2x1
jax: 0.10.0
libtpu: 0.0.40
codegen_flags: <defaults>
</compile_context>

<pallas_src>
import math

import jax
import jax.numpy as jnp
from jax.experimental import pallas as pl
from jax.experimental.pallas import tpu as pltpu


def _timefeat_kernel(x_ref, w_ref, o_ref):
    # x_ref: (TB, KP)  packed time features        (KP = pack * d_inp)
    # w_ref: (KP, PD)  packed block-diagonal W^T   (PD = pack * d_model, lane-dense)
    # o_ref: (TB, PD)  packed output rows
    #
    # Contraction on the MXU.  For f32 operands use HIGHEST precision (full f32
    # accuracy, still far under the tile DMA time since the MXU is otherwise idle);
    # bf16 operands take the single-pass bf16 MXU path automatically.
    prec = jax.lax.Precision.HIGHEST if x_ref.dtype == jnp.float32 else None
    o_ref[...] = jnp.dot(
        x_ref[...],
        w_ref[...],
        preferred_element_type=jnp.float32,
        precision=prec,
    ).astype(o_ref.dtype)


def _round_up(a, b):
    return -(-a // b) * b


def _pack_weight(weight, pack, dtype):
    """weight: (d_model, d_inp) in nn.Linear layout.

    Returns the (pack*d_inp, pack*d_model) block-diagonal packed W^T used by the
    packed-row formulation.  Tiny (a few KiB); in a real model compute it once at
    parameter-load time instead of per call.
    """
    wt = weight.T.astype(dtype)  # (d_inp, d_model)
    if pack == 1:
        return wt
    return jnp.kron(jnp.eye(pack, dtype=dtype), wt)


def time_feature_embedding(x, weight, *, max_block_rows=8192):
    """x: (B, L, d_inp); weight: (d_model, d_inp) (nn.Linear layout, no bias).

    Returns (B, L, d_model) = x @ weight.T
    """
    B, L, d_inp = x.shape
    d_model = weight.shape[0]
    assert weight.shape[1] == d_inp
    M = B * L
    dtype = x.dtype
    itemsize = jnp.dtype(dtype).itemsize
    sub = 16 if itemsize == 2 else 8  # sublane multiple (bf16 packs 2 rows / sublane)

    # Row-packing factor so the kernel output last dim is a multiple of 128 lanes
    # (unmasked full-lane stores).  Generalized to any d_model < 128 via lcm.
    if d_model < 128:
        pack = math.lcm(d_model, 128) // d_model
        if pack * d_model > 1024:
            # Pathological d_model (e.g. large prime): correct pack=1 fallback.
            # TODO(synk): pad PD up to 128 and strip in a fused consumer instead.
            pack = 1
    else:
        pack = 1
    KP = pack * d_inp
    PD = pack * d_model

    # Tiny resident packed W^T (constant-foldable under jit).
    w_packed = _pack_weight(weight, pack, dtype)  # (KP, PD)

    # Row tile: as big as fits a ~4 MiB output tile (double-buffered footprint stays
    # well inside the 32 MiB scoped-VMEM default on v5e/v6e/v7x).  When there is
    # enough work, split into >= 2 blocks so the "parallel" grid axis can shard
    # across v7x's two TensorCores.
    M4 = -(-M // pack)  # packed rows needed
    cap = max(sub, (4 * 1024 * 1024 // max(PD * itemsize, 1)) // sub * sub)
    cap = min(cap, max(max_block_rows, sub))
    if M4 <= cap:
        TB = _round_up(M4, sub)
        if TB >= 2048:
            TB = _round_up(-(-M4 // 2), sub)  # 2 blocks -> both TCs get work on v7x
    else:
        TB = cap
    M4_pad = _round_up(M4, TB)
    M_pad = M4_pad * pack

    x2 = x.reshape(M, d_inp)
    if M_pad != M:
        # Only taken when M does not already divide the packed tile.
        # TODO(synk): handle the ragged last tile in-kernel (masked store) or pad at
        # the data-pipeline level to avoid this extra HBM copy for large ragged M.
        x2 = jnp.pad(x2, ((0, M_pad - M), (0, 0)))
    x_packed = x2.reshape(M4_pad, KP)  # row-major repack (bit-identical data order)

    grid = (M4_pad // TB,)

    out_packed = pl.pallas_call(
        _timefeat_kernel,
        out_shape=jax.ShapeDtypeStruct((M4_pad, PD), dtype),
        grid_spec=pl.GridSpec(
            grid=grid,
            in_specs=[
                pl.BlockSpec((TB, KP), lambda i: (i, 0)),  # streamed, double-buffered
                pl.BlockSpec((KP, PD), lambda i: (0, 0)),  # weight resident in VMEM
            ],
            out_specs=pl.BlockSpec((TB, PD), lambda i: (i, 0)),
        ),
        compiler_params=pltpu.CompilerParams(
            # Row tiles are independent -> megacore / 2-TC shardable on v7x.
            dimension_semantics=("parallel",),
        ),
    )(x_packed, w_packed)

    out = out_packed.reshape(M_pad, d_model)
    if M_pad != M:
        out = out[:M]
    return out.reshape(B, L, d_model)


if __name__ == "__main__":
    # freq='h' -> d_inp = 4 ; small d_model for the demo
    d_inp = 4
    d_model = 32
    B, L = 2, 8

    key = jax.random.PRNGKey(0)
    kx, kw = jax.random.split(key)

    x = jax.random.normal(kx, (B, L, d_inp), dtype=jnp.float32)
    # Deterministic init mimicking nn.Linear default U(-1/sqrt(fan_in), 1/sqrt(fan_in))
    bound = 1.0 / jnp.sqrt(jnp.float32(d_inp))
    weight = jax.random.uniform(
        kw, (d_model, d_inp), dtype=jnp.float32, minval=-bound, maxval=bound
    )

    fn = jax.jit(time_feature_embedding)
    out = jax.block_until_ready(fn(x, weight))

    # Correctness check vs plain JAX reference (x @ W^T), both at full f32 precision.
    ref = jnp.einsum("bld,md->blm", x, weight, precision=jax.lax.Precision.HIGHEST)
    assert out.shape == (B, L, d_model)
    assert jnp.allclose(out, ref, atol=1e-5, rtol=1e-5)

    print("KERNEL_OK")
</pallas_src>

<mosaic_0001>
module attributes {stable_mosaic.version = 11 : i64} {
  func.func @_timefeat_kernel(%arg0: i32, %arg1: memref<8x16xf32, #tpu.memory_space<vmem>>, %arg2: memref<16x128xf32, #tpu.memory_space<vmem>>, %arg3: memref<8x128xf32, #tpu.memory_space<vmem>>) attributes {dimension_semantics = [#tpu.dimension_semantics<parallel>], iteration_bounds = array<i64: 1>, scalar_prefetch = 0 : i64, scratch_operands = 0 : i64, tpu.core_type = #tpu.core_type<tc>, window_params = [{transform_indices = @transform_0, window_bounds = array<i64: 8, 16>}, {pipeline_mode = #tpu.pipeline_mode<synchronous>, transform_indices = @transform_1, window_bounds = array<i64: 16, 128>}, {transform_indices = @transform_2, window_bounds = array<i64: 8, 128>}]} {
    %c0 = arith.constant 0 : index
    %c0_0 = arith.constant 0 : index
    %0 = vector.load %arg1[%c0, %c0_0] : memref<8x16xf32, #tpu.memory_space<vmem>>, vector<8x16xf32>
    %c0_1 = arith.constant 0 : index
    %c0_2 = arith.constant 0 : index
    %1 = vector.load %arg2[%c0_1, %c0_2] : memref<16x128xf32, #tpu.memory_space<vmem>>, vector<16x128xf32>
    %cst = arith.constant dense<0.000000e+00> : vector<8x128xf32>
    %2 = tpu.matmul %0, %1, %cst {dimension_numbers = #tpu.dot_dimension_numbers<[1], [0], [0], [1], [0, 0, 1, 1], [], []>, precision = #tpu.contract_precision<fp32>} : vector<8x16xf32>, vector<16x128xf32>, vector<8x128xf32> -> vector<8x128xf32>
    %c0_3 = arith.constant 0 : index
    %c0_4 = arith.constant 0 : index
    %3 = vector.load %arg3[%c0_3, %c0_4] : memref<8x128xf32, #tpu.memory_space<vmem>>, vector<8x128xf32>
    tpu.vector_store %arg3[%c0_3, %c0_4], %2 {strides = array<i32>} : memref<8x128xf32, #tpu.memory_space<vmem>>, vector<8x128xf32>,
    return
  }
  func.func @transform_0(%arg0: i32) -> (i32, i32) {
    %c0_i32 = arith.constant 0 : i32
    %c0_i32_0 = arith.constant 0 : i32
    return %arg0, %c0_i32 : i32, i32
  }
  func.func @transform_1(%arg0: i32) -> (i32, i32) {
    %c0_i32 = arith.constant 0 : i32
    %c0_i32_0 = arith.constant 0 : i32
    %c0_i32_1 = arith.constant 0 : i32
    return %c0_i32, %c0_i32_0 : i32, i32
  }
  func.func @transform_2(%arg0: i32) -> (i32, i32) {
    %c0_i32 = arith.constant 0 : i32
    %c0_i32_0 = arith.constant 0 : i32
    return %arg0, %c0_i32 : i32, i32
  }
}

</mosaic_0001>

<llo_original>
// kernel: time_feature_embedding.1
$region0: #{time_feature_embedding.1}
  #allocation0 [shape = 'u32[]', space=smem, size = 0x4, offset = 0x4, fixed_abs, tag = 'smem constant byte address 0x4 - core index']
  #allocation1 [shape = 'u32[144,128]{1,0:T(1,128)}', space=vmem, size = 0x12000, scoped, tag = 'internal scratch']
  %s0 = inlined_call_operand.vmem [shape: f32[8,16], index: 0, kind: input, shape index: {}]
  %s1 = inlined_call_operand.vmem [shape: f32[16,128], index: 1, kind: input, shape index: {}]
  %s2 = inlined_call_operand.vmem [shape: f32[8,128], index: 2, kind: output, shape index: {}]
  %s3 = sld [smem:[#allocation0]]
  $region18: #{time_feature_embedding.1} parent=0
    _
  %s5 = ssub.s32 1, %s3
  %s6 = scalar_select 0, %s5, %s3
  // Predicated region
  $region2: #{time_feature_embedding.1} parent=0 // pred_check
    _
  $region3: #{time_feature_embedding.1} parent=0 // pred_check_branch
    %8 = sbr.rel (0) target = $region5
  $region4: #{time_feature_embedding.1} parent=0 // pred_region
    _
  $region5: #{time_feature_embedding.1} parent=0 // pred_fallthru
    _
  // Predicated region
  $region6: #{time_feature_embedding.1} parent=0 // pred_check
    _
  $region7: #{time_feature_embedding.1} parent=0 // pred_check_branch
    %10 = sbr.rel (0) target = $region9
  $region8: #{time_feature_embedding.1} parent=0 // pred_region
    _
  $region9: #{time_feature_embedding.1} parent=0 // pred_fallthru
    _
  %v11 = vld [vmem:[%s0] sm:$0xff]
  %v12 = vld [vmem:[%s1] sm:$0xff]
  %v13 = vld [vmem:[%s1 + $0x8] sm:$0xff]
  %vm14 = vcmask 130048
  %v16 = vsel %vm14, %v11, 0
  %18 = vmatprep.subr.mxu0 0.0
  %v19 = vand.u32 %v12, 4294901760
  %20 = vmatpush1.msra.mxu0 %v19
  %21 = vmatprep.subr.mxu0 0.0
  %v22 = vand.u32 %v13, 4294901760
  %23 = vmatpush1.msra.mxu0 %v22
  %24 = vmatprep.subr.mxu0 0.0
  %25 = vmatpush1.msra.mxu0 0.0
  %26 = vmatprep.subr.mxu0 0.0
  %27 = vmatpush1.msra.mxu0 0.0
  %28 = vmatprep.subr.mxu0 0.0
  %29 = vmatpush1.msra.mxu0 0.0
  %30 = vmatprep.subr.mxu0 0.0
  %31 = vmatpush1.msra.mxu0 0.0
  %32 = vmatprep.subr.mxu0 0.0
  %33 = vmatpush1.msra.mxu0 0.0
  %34 = vmatprep.subr.mxu0 0.0
  %35 = vmatpush1.msra.mxu0 0.0
  %36 = vmatprep.subr.mxu0 0.0
  %37 = vmatpush1.msra.mxu0 0.0
  %38 = vmatprep.subr.mxu0 0.0
  %39 = vmatpush1.msra.mxu0 0.0
  %40 = vmatprep.subr.mxu0 0.0
  %41 = vmatpush1.msra.mxu0 0.0
  %42 = vmatprep.subr.mxu0 0.0
  %43 = vmatpush1.msra.mxu0 0.0
  %44 = vmatprep.subr.mxu0 0.0
  %45 = vmatpush1.msra.mxu0 0.0
  %46 = vmatprep.subr.mxu0 0.0
  %47 = vmatpush1.msra.mxu0 0.0
  %48 = vmatprep.subr.mxu0 0.0
  %49 = vmatpush1.msra.mxu0 0.0
  %50 = vmatprep.subr.mxu0 0.0
  %51 = vmatpush1.msra.mxu0 0.0
  %52 = vmatprep.subr.mxu0 0.0
  %53 = vmatpush1.msra.mxu0 0.0
  %54 = vmatprep.subr.mxu0 0.0
  %55 = vmatpush1.msra.mxu0 0.0
  %56 = vmatprep.subr.mxu0 0.0
  %57 = vmatpush1.msra.mxu0 0.0
  %58 = vmatprep.subr.mxu0 0.0
  %59 = vmatpush1.msra.mxu0 0.0
  %60 = vmatprep.subr.mxu0 0.0
  %61 = vmatpush1.msra.mxu0 0.0
  %62 = vmatprep.subr.mxu0 0.0
  %63 = vmatpush1.msra.mxu0 0.0
  %64 = vmatprep.subr.mxu0 0.0
  %65 = vmatpush1.msra.mxu0 0.0
  %66 = vmatprep.subr.mxu0 0.0
  %67 = vmatpush1.msra.mxu0 0.0
  %68 = vmatprep.subr.mxu0 0.0
  %69 = vmatpush1.msra.mxu0 0.0
  %70 = vmatprep.subr.mxu0 0.0
  %71 = vmatpush1.msra.mxu0 0.0
  %72 = vmatprep.subr.mxu0 0.0
  %73 = vmatpush1.msra.mxu0 0.0
  %74 = vmatprep.subr.mxu0 0.0
  %75 = vmatpush1.msra.mxu0 0.0
  %76 = vmatprep.subr.mxu0 0.0
  %77 = vmatpush1.msra.mxu0 0.0
  %78 = vmatprep.subr.mxu0 0.0
  %79 = vmatpush1.msra.mxu0 0.0
  %80 = vmatprep.subr.mxu0 0.0
  %81 = vmatpush1.msra.mxu0 0.0
  %82 = vmatprep.subr.mxu0 0.0
  %83 = vmatpush1.msra.mxu0 0.0
  %84 = vmatprep.mubr.f32.mxu0 0.0
  %v85 = vand.u32 %v16, 4294901760
  %v86 = vsub.f32 %v16, %v85
  %v87 = vand.u32 %v86, 4294901760
  %v88 = vsub.f32 %v86, %v87
  %v89 = vand.u32 %v88, 4294901760
  %90 = vmatmul.mubr.f32.gmra.mrb[0].mxu0 %v89
  %v91 = vpop.f32.mrb[0].mxu0
  %v92 = vadd.f32 0.0, %v91
  %v93 = vpop.f32.mrb[0].mxu0
  %94 = vdwg.mxu0
  %95 = vmatprep.subr.mxu0 0.0
  %v96 = vand.u32 %v12, 4294901760
  %v97 = vsub.f32 %v12, %v96
  %v98 = vand.u32 %v97, 4294901760
  %v99 = vsub.f32 %v97, %v98
  %v100 = vand.u32 %v99, 4294901760
  %101 = vmatpush1.msra.mxu0 %v100
  %102 = vmatprep.subr.mxu0 0.0
  %v103 = vand.u32 %v13, 4294901760
  %v104 = vsub.f32 %v13, %v103
  %v105 = vand.u32 %v104, 4294901760
  %v106 = vsub.f32 %v104, %v105
  %v107 = vand.u32 %v106, 4294901760
  %108 = vmatpush1.msra.mxu0 %v107
  %109 = vmatprep.subr.mxu0 0.0
  %110 = vmatpush1.msra.mxu0 0.0
  %111 = vmatprep.subr.mxu0 0.0
  %112 = vmatpush1.msra.mxu0 0.0
  %113 = vmatprep.subr.mxu0 0.0
  %114 = vmatpush1.msra.mxu0 0.0
  %115 = vmatprep.subr.mxu0 0.0
  %116 = vmatpush1.msra.mxu0 0.0
  %117 = vmatprep.subr.mxu0 0.0
  %118 = vmatpush1.msra.mxu0 0.0
  %119 = vmatprep.subr.mxu0 0.0
  %120 = vmatpush1.msra.mxu0 0.0
  %121 = vmatprep.subr.mxu0 0.0
  %122 = vmatpush1.msra.mxu0 0.0
  %123 = vmatprep.subr.mxu0 0.0
  %124 = vmatpush1.msra.mxu0 0.0
  %125 = vmatprep.subr.mxu0 0.0
  %126 = vmatpush1.msra.mxu0 0.0
  %127 = vmatprep.subr.mxu0 0.0
  %128 = vmatpush1.msra.mxu0 0.0
  %129 = vmatprep.subr.mxu0 0.0
  %130 = vmatpush1.msra.mxu0 0.0
  %131 = vmatprep.subr.mxu0 0.0
  %132 = vmatpush1.msra.mxu0 0.0
  %133 = vmatprep.subr.mxu0 0.0
  %134 = vmatpush1.msra.mxu0 0.0
  %135 = vmatprep.subr.mxu0 0.0
  %136 = vmatpush1.msra.mxu0 0.0
  %137 = vmatprep.subr.mxu0 0.0
  %138 = vmatpush1.msra.mxu0 0.0
  %139 = vmatprep.subr.mxu0 0.0
  %140 = vmatpush1.msra.mxu0 0.0
  %141 = vmatprep.subr.mxu0 0.0
  %142 = vmatpush1.msra.mxu0 0.0
  %143 = vmatprep.subr.mxu0 0.0
  %144 = vmatpush1.msra.mxu0 0.0
  %145 = vmatprep.subr.mxu0 0.0
  %146 = vmatpush1.msra.mxu0 0.0
  %147 = vmatprep.subr.mxu0 0.0
  %148 = vmatpush1.msra.mxu0 0.0
  %149 = vmatprep.subr.mxu0 0.0
  %150 = vmatpush1.msra.mxu0 0.0
  %151 = vmatprep.subr.mxu0 0.0
  %152 = vmatpush1.msra.mxu0 0.0
  %153 = vmatprep.subr.mxu0 0.0
  %154 = vmatpush1.msra.mxu0 0.0
  %155 = vmatprep.subr.mxu0 0.0
  %156 = vmatpush1.msra.mxu0 0.0
  %157 = vmatprep.subr.mxu0 0.0
  %158 = vmatpush1.msra.mxu0 0.0
  %159 = vmatprep.subr.mxu0 0.0
  %160 = vmatpush1.msra.mxu0 0.0
  %161 = vmatprep.subr.mxu0 0.0
  %162 = vmatpush1.msra.mxu0 0.0
  %163 = vmatprep.subr.mxu0 0.0
  %164 = vmatpush1.msra.mxu0 0.0
  %165 = vmatprep.subr.mxu0 0.0
  %166 = vmatpush1.msra.mxu0 0.0
  %167 = vmatprep.subr.mxu0 0.0
  %168 = vmatpush1.msra.mxu0 0.0
  %169 = vmatprep.mubr.f32.mxu0 0.0
  %v170 = vand.u32 %v16, 4294901760
  %171 = vmatmul.mubr.f32.gmra.mrb[0].mxu0 %v170
  %v172 = vpop.f32.mrb[0].mxu0
  %v173 = vadd.f32 %v92, %v172
  %v174 = vpop.f32.mrb[0].mxu0
  %175 = vdwg.mxu0
  %176 = vmatprep.subr.mxu0 0.0
  %v177 = vand.u32 %v12, 4294901760
  %v178 = vsub.f32 %v12, %v177
  %179 = vmatpush1.msra.mxu0 %v178
  %180 = vmatprep.subr.mxu0 0.0
  %v181 = vand.u32 %v13, 4294901760
  %v182 = vsub.f32 %v13, %v181
  %183 = vmatpush1.msra.mxu0 %v182
  %184 = vmatprep.subr.mxu0 0.0
  %185 = vmatpush1.msra.mxu0 0.0
  %186 = vmatprep.subr.mxu0 0.0
  %187 = vmatpush1.msra.mxu0 0.0
  %188 = vmatprep.subr.mxu0 0.0
  %189 = vmatpush1.msra.mxu0 0.0
  %190 = vmatprep.subr.mxu0 0.0
  %191 = vmatpush1.msra.mxu0 0.0
  %192 = vmatprep.subr.mxu0 0.0
  %193 = vmatpush1.msra.mxu0 0.0
  %194 = vmatprep.subr.mxu0 0.0
  %195 = vmatpush1.msra.mxu0 0.0
  %196 = vmatprep.subr.mxu0 0.0
  %197 = vmatpush1.msra.mxu0 0.0
  %198 = vmatprep.subr.mxu0 0.0
  %199 = vmatpush1.msra.mxu0 0.0
  %200 = vmatprep.subr.mxu0 0.0
  %201 = vmatpush1.msra.mxu0 0.0
  %202 = vmatprep.subr.mxu0 0.0
  %203 = vmatpush1.msra.mxu0 0.0
  %204 = vmatprep.subr.mxu0 0.0
  %205 = vmatpush1.msra.mxu0 0.0
  %206 = vmatprep.subr.mxu0 0.0
  %207 = vmatpush1.msra.mxu0 0.0
  %208 = vmatprep.subr.mxu0 0.0
  %209 = vmatpush1.msra.mxu0 0.0
  %210 = vmatprep.subr.mxu0 0.0
  %211 = vmatpush1.msra.mxu0 0.0
  %212 = vmatprep.subr.mxu0 0.0
  %213 = vmatpush1.msra.mxu0 0.0
  %214 = vmatprep.subr.mxu0 0.0
  %215 = vmatpush1.msra.mxu0 0.0
  %216 = vmatprep.subr.mxu0 0.0
  %217 = vmatpush1.msra.mxu0 0.0
  %218 = vmatprep.subr.mxu0 0.0
  %219 = vmatpush1.msra.mxu0 0.0
  %220 = vmatprep.subr.mxu0 0.0
  %221 = vmatpush1.msra.mxu0 0.0
  %222 = vmatprep.subr.mxu0 0.0
  %223 = vmatpush1.msra.mxu0 0.0
  %224 = vmatprep.subr.mxu0 0.0
  %225 = vmatpush1.msra.mxu0 0.0
  %226 = vmatprep.subr.mxu0 0.0
  %227 = vmatpush1.msra.mxu0 0.0
  %228 = vmatprep.subr.mxu0 0.0
  %229 = vmatpush1.msra.mxu0 0.0
  %230 = vmatprep.subr.mxu0 0.0
  %231 = vmatpush1.msra.mxu0 0.0
  %232 = vmatprep.subr.mxu0 0.0
  %233 = vmatpush1.msra.mxu0 0.0
  %234 = vmatprep.subr.mxu0 0.0
  %235 = vmatpush1.msra.mxu0 0.0
  %236 = vmatprep.subr.mxu0 0.0
  %237 = vmatpush1.msra.mxu0 0.0
  %238 = vmatprep.subr.mxu0 0.0
  %239 = vmatpush1.msra.mxu0 0.0
  %240 = vmatprep.subr.mxu0 0.0
  %241 = vmatpush1.msra.mxu0 0.0
  %242 = vmatprep.subr.mxu0 0.0
  %243 = vmatpush1.msra.mxu0 0.0
  %244 = vmatprep.mubr.f32.mxu0 0.0
  %v245 = vand.u32 %v16, 4294901760
  %v246 = vsub.f32 %v16, %v245
  %247 = vmatmul.mubr.f32.gmra.mrb[0].mxu0 %v246
  %v248 = vpop.f32.mrb[0].mxu0
  %v249 = vadd.f32 %v173, %v248
  %v250 = vpop.f32.mrb[0].mxu0
  %251 = vdwg.mxu0
  %252 = vmatprep.subr.mxu0 0.0
  %v253 = vand.u32 %v12, 4294901760
  %254 = vmatpush1.msra.mxu0 %v253
  %255 = vmatprep.subr.mxu0 0.0
  %v256 = vand.u32 %v13, 4294901760
  %257 = vmatpush1.msra.mxu0 %v256
  %258 = vmatprep.subr.mxu0 0.0
  %259 = vmatpush1.msra.mxu0 0.0
  %260 = vmatprep.subr.mxu0 0.0
  %261 = vmatpush1.msra.mxu0 0.0
  %262 = vmatprep.subr.mxu0 0.0
  %263 = vmatpush1.msra.mxu0 0.0
  %264 = vmatprep.subr.mxu0 0.0
  %265 = vmatpush1.msra.mxu0 0.0
  %266 = vmatprep.subr.mxu0 0.0
  %267 = vmatpush1.msra.mxu0 0.0
  %268 = vmatprep.subr.mxu0 0.0
  %269 = vmatpush1.msra.mxu0 0.0
  %270 = vmatprep.subr.mxu0 0.0
  %271 = vmatpush1.msra.mxu0 0.0
  %272 = vmatprep.subr.mxu0 0.0
  %273 = vmatpush1.msra.mxu0 0.0
  %274 = vmatprep.subr.mxu0 0.0
  %275 = vmatpush1.msra.mxu0 0.0
  %276 = vmatprep.subr.mxu0 0.0
  %277 = vmatpush1.msra.mxu0 0.0
  %278 = vmatprep.subr.mxu0 0.0
  %279 = vmatpush1.msra.mxu0 0.0
  %280 = vmatprep.subr.mxu0 0.0
  %281 = vmatpush1.msra.mxu0 0.0
  %282 = vmatprep.subr.mxu0 0.0
  %283 = vmatpush1.msra.mxu0 0.0
  %284 = vmatprep.subr.mxu0 0.0
  %285 = vmatpush1.msra.mxu0 0.0
  %286 = vmatprep.subr.mxu0 0.0
  %287 = vmatpush1.msra.mxu0 0.0
  %288 = vmatprep.subr.mxu0 0.0
  %289 = vmatpush1.msra.mxu0 0.0
  %290 = vmatprep.subr.mxu0 0.0
  %291 = vmatpush1.msra.mxu0 0.0
  %292 = vmatprep.subr.mxu0 0.0
  %293 = vmatpush1.msra.mxu0 0.0
  %294 = vmatprep.subr.mxu0 0.0
  %295 = vmatpush1.msra.mxu0 0.0
  %296 = vmatprep.subr.mxu0 0.0
  %297 = vmatpush1.msra.mxu0 0.0
  %298 = vmatprep.subr.mxu0 0.0
  %299 = vmatpush1.msra.mxu0 0.0
  %300 = vmatprep.subr.mxu0 0.0
  %301 = vmatpush1.msra.mxu0 0.0
  %302 = vmatprep.subr.mxu0 0.0
  %303 = vmatpush1.msra.mxu0 0.0
  %304 = vmatprep.subr.mxu0 0.0
  %305 = vmatpush1.msra.mxu0 0.0
  %306 = vmatprep.subr.mxu0 0.0
  %307 = vmatpush1.msra.mxu0 0.0
  %308 = vmatprep.subr.mxu0 0.0
  %309 = vmatpush1.msra.mxu0 0.0
  %310 = vmatprep.subr.mxu0 0.0
  %311 = vmatpush1.msra.mxu0 0.0
  %312 = vmatprep.subr.mxu0 0.0
  %313 = vmatpush1.msra.mxu0 0.0
  %314 = vmatprep.subr.mxu0 0.0
  %315 = vmatpush1.msra.mxu0 0.0
  %316 = vmatprep.subr.mxu0 0.0
  %317 = vmatpush1.msra.mxu0 0.0
  %318 = vmatprep.mubr.f32.mxu0 0.0
  %v319 = vand.u32 %v16, 4294901760
  %v320 = vsub.f32 %v16, %v319
  %v321 = vand.u32 %v320, 4294901760
  %322 = vmatmul.mubr.f32.gmra.mrb[0].mxu0 %v321
  %v323 = vpop.f32.mrb[0].mxu0
  %v324 = vadd.f32 %v249, %v323
  %v325 = vpop.f32.mrb[0].mxu0
  %326 = vdwg.mxu0
  %327 = vmatprep.subr.mxu0 0.0
  %v328 = vand.u32 %v12, 4294901760
  %v329 = vsub.f32 %v12, %v328
  %v330 = vand.u32 %v329, 4294901760
  %331 = vmatpush1.msra.mxu0 %v330
  %332 = vmatprep.subr.mxu0 0.0
  %v333 = vand.u32 %v13, 4294901760
  %v334 = vsub.f32 %v13, %v333
  %v335 = vand.u32 %v334, 4294901760
  %336 = vmatpush1.msra.mxu0 %v335
  %337 = vmatprep.subr.mxu0 0.0
  %338 = vmatpush1.msra.mxu0 0.0
  %339 = vmatprep.subr.mxu0 0.0
  %340 = vmatpush1.msra.mxu0 0.0
  %341 = vmatprep.subr.mxu0 0.0
  %342 = vmatpush1.msra.mxu0 0.0
  %343 = vmatprep.subr.mxu0 0.0
  %344 = vmatpush1.msra.mxu0 0.0
  %345 = vmatprep.subr.mxu0 0.0
  %346 = vmatpush1.msra.mxu0 0.0
  %347 = vmatprep.subr.mxu0 0.0
  %348 = vmatpush1.msra.mxu0 0.0
  %349 = vmatprep.subr.mxu0 0.0
  %350 = vmatpush1.msra.mxu0 0.0
  %351 = vmatprep.subr.mxu0 0.0
  %352 = vmatpush1.msra.mxu0 0.0
  %353 = vmatprep.subr.mxu0 0.0
  %354 = vmatpush1.msra.mxu0 0.0
  %355 = vmatprep.subr.mxu0 0.0
  %356 = vmatpush1.msra.mxu0 0.0
  %357 = vmatprep.subr.mxu0 0.0
  %358 = vmatpush1.msra.mxu0 0.0
  %359 = vmatprep.subr.mxu0 0.0
  %360 = vmatpush1.msra.mxu0 0.0
  %361 = vmatprep.subr.mxu0 0.0
  %362 = vmatpush1.msra.mxu0 0.0
  %363 = vmatprep.subr.mxu0 0.0
  %364 = vmatpush1.msra.mxu0 0.0
  %365 = vmatprep.subr.mxu0 0.0
  %366 = vmatpush1.msra.mxu0 0.0
  %367 = vmatprep.subr.mxu0 0.0
  %368 = vmatpush1.msra.mxu0 0.0
  %369 = vmatprep.subr.mxu0 0.0
  %370 = vmatpush1.msra.mxu0 0.0
  %371 = vmatprep.subr.mxu0 0.0
  %372 = vmatpush1.msra.mxu0 0.0
  %373 = vmatprep.subr.mxu0 0.0
  %374 = vmatpush1.msra.mxu0 0.0
  %375 = vmatprep.subr.mxu0 0.0
  %376 = vmatpush1.msra.mxu0 0.0
  %377 = vmatprep.subr.mxu0 0.0
  %378 = vmatpush1.msra.mxu0 0.0
  %379 = vmatprep.subr.mxu0 0.0
  %380 = vmatpush1.msra.mxu0 0.0
  %381 = vmatprep.subr.mxu0 0.0
  %382 = vmatpush1.msra.mxu0 0.0
  %383 = vmatprep.subr.mxu0 0.0
  %384 = vmatpush1.msra.mxu0 0.0
  %385 = vmatprep.subr.mxu0 0.0
  %386 = vmatpush1.msra.mxu0 0.0
  %387 = vmatprep.subr.mxu0 0.0
  %388 = vmatpush1.msra.mxu0 0.0
  %389 = vmatprep.subr.mxu0 0.0
  %390 = vmatpush1.msra.mxu0 0.0
  %391 = vmatprep.subr.mxu0 0.0
  %392 = vmatpush1.msra.mxu0 0.0
  %393 = vmatprep.subr.mxu0 0.0
  %394 = vmatpush1.msra.mxu0 0.0
  %395 = vmatprep.subr.mxu0 0.0
  %396 = vmatpush1.msra.mxu0 0.0
  %397 = vmatprep.mubr.f32.mxu0 0.0
  %v398 = vand.u32 %v16, 4294901760
  %399 = vmatmul.mubr.f32.gmra.mrb[0].mxu0 %v398
  %v400 = vpop.f32.mrb[0].mxu0
  %v401 = vadd.f32 %v324, %v400
  %v402 = vpop.f32.mrb[0].mxu0
  %403 = vdwg.mxu0
  %404 = vmatprep.subr.mxu0 0.0
  %v405 = vand.u32 %v12, 4294901760
  %406 = vmatpush1.msra.mxu0 %v405
  %407 = vmatprep.subr.mxu0 0.0
  %v408 = vand.u32 %v13, 4294901760
  %409 = vmatpush1.msra.mxu0 %v408
  %410 = vmatprep.subr.mxu0 0.0
  %411 = vmatpush1.msra.mxu0 0.0
  %412 = vmatprep.subr.mxu0 0.0
  %413 = vmatpush1.msra.mxu0 0.0
  %414 = vmatprep.subr.mxu0 0.0
  %415 = vmatpush1.msra.mxu0 0.0
  %416 = vmatprep.subr.mxu0 0.0
  %417 = vmatpush1.msra.mxu0 0.0
  %418 = vmatprep.subr.mxu0 0.0
  %419 = vmatpush1.msra.mxu0 0.0
  %420 = vmatprep.subr.mxu0 0.0
  %421 = vmatpush1.msra.mxu0 0.0
  %422 = vmatprep.subr.mxu0 0.0
  %423 = vmatpush1.msra.mxu0 0.0
  %424 = vmatprep.subr.mxu0 0.0
  %425 = vmatpush1.msra.mxu0 0.0
  %426 = vmatprep.subr.mxu0 0.0
  %427 = vmatpush1.msra.mxu0 0.0
  %428 = vmatprep.subr.mxu0 0.0
  %429 = vmatpush1.msra.mxu0 0.0
  %430 = vmatprep.subr.mxu0 0.0
  %431 = vmatpush1.msra.mxu0 0.0
  %432 = vmatprep.subr.mxu0 0.0
  %433 = vmatpush1.msra.mxu0 0.0
  %434 = vmatprep.subr.mxu0 0.0
  %435 = vmatpush1.msra.mxu0 0.0
  %436 = vmatprep.subr.mxu0 0.0
  %437 = vmatpush1.msra.mxu0 0.0
  %438 = vmatprep.subr.mxu0 0.0
  %439 = vmatpush1.msra.mxu0 0.0
  %440 = vmatprep.subr.mxu0 0.0
  %441 = vmatpush1.msra.mxu0 0.0
  %442 = vmatprep.subr.mxu0 0.0
  %443 = vmatpush1.msra.mxu0 0.0
  %444 = vmatprep.subr.mxu0 0.0
  %445 = vmatpush1.msra.mxu0 0.0
  %446 = vmatprep.subr.mxu0 0.0
  %447 = vmatpush1.msra.mxu0 0.0
  %448 = vmatprep.subr.mxu0 0.0
  %449 = vmatpush1.msra.mxu0 0.0
  %450 = vmatprep.subr.mxu0 0.0
  %451 = vmatpush1.msra.mxu0 0.0
  %452 = vmatprep.subr.mxu0 0.0
  %453 = vmatpush1.msra.mxu0 0.0
  %454 = vmatprep.subr.mxu0 0.0
  %455 = vmatpush1.msra.mxu0 0.0
  %456 = vmatprep.subr.mxu0 0.0
  %457 = vmatpush1.msra.mxu0 0.0
  %458 = vmatprep.subr.mxu0 0.0
  %459 = vmatpush1.msra.mxu0 0.0
  %460 = vmatprep.subr.mxu0 0.0
  %461 = vmatpush1.msra.mxu0 0.0
  %462 = vmatprep.subr.mxu0 0.0
  %463 = vmatpush1.msra.mxu0 0.0
  %464 = vmatprep.subr.mxu0 0.0
  %465 = vmatpush1.msra.mxu0 0.0
  %466 = vmatprep.subr.mxu0 0.0
  %467 = vmatpush1.msra.mxu0 0.0
  %468 = vmatprep.subr.mxu0 0.0
  %469 = vmatpush1.msra.mxu0 0.0
  %470 = vmatprep.mubr.f32.mxu0 0.0
  %v471 = vand.u32 %v16, 4294901760
  %472 = vmatmul.mubr.f32.gmra.mrb[0].mxu0 %v471
  %v473 = vpop.f32.mrb[0].mxu0
  %v474 = vadd.f32 %v401, %v473
  %v475 = vpop.f32.mrb[0].mxu0
  %476 = vdwg.mxu0
  %477 = vst [vmem:[%s2] sm:$0xff] %v474
  // Predicated region
  $region10: #{time_feature_embedding.1} parent=0 // pred_check
    _
  $region11: #{time_feature_embedding.1} parent=0 // pred_check_branch
    %479 = sbr.rel (0) target = $region13
  $region12: #{time_feature_embedding.1} parent=0 // pred_region
    _
  $region13: #{time_feature_embedding.1} parent=0 // pred_fallthru
    _
  // Predicated region
  $region14: #{time_feature_embedding.1} parent=0 // pred_check
    _
  $region15: #{time_feature_embedding.1} parent=0 // pred_check_branch
    %481 = sbr.rel (0) target = $region17
  $region16: #{time_feature_embedding.1} parent=0 // pred_region
    _
  $region17: #{time_feature_embedding.1} parent=0 // pred_fallthru
    _

</llo_original>
